<compile_context>
chip_gen: v7x
topology: tpu7x:2x2x1
jax: 0.10.0
libtpu: 0.0.40
codegen_flags: <defaults>
</compile_context>

<pallas_src>
import numpy as np
import jax
import jax.numpy as jnp
from jax import lax
from jax.experimental import pallas as pl
from jax.experimental.pallas import tpu as pltpu


def _round_up(x, m):
    return ((x + m - 1) // m) * m


def _lstm_kernel(maxlen_ref, x_ref, len_ref, wih_ref, whh_ref, b_ref,
                 out_ref, xw_sc, h_sc, c_sc):
    """Single grid step: projection matmul + in-kernel time recurrence.

    maxlen_ref : SMEM (1,) int32   scalar-prefetched max(lengths)
    x_ref      : (T*Bp, D)  bf16   time-major rows (row = t*Bp + b)
    len_ref    : (Bp, 1)    int32  clamped valid lengths (padded rows = 1)
    wih_ref    : (D, 4*Hp)  bf16   gate-padded W_ih^T
    whh_ref    : (Hp, 4*Hp) bf16   gate-padded W_hh^T
    b_ref      : (1, 4*Hp)  f32    gate-padded (b_ih + b_hh)
    out_ref    : (Bp, Hp)   f32    final hidden state
    xw_sc      : (T*Bp, 4*Hp) f32  hoisted input projection
    h_sc, c_sc : (Bp, Hp)   f32    recurrent state
    """
    Bp, Hp = h_sc.shape

    # ---- Phase 1: hoisted input projection, one big MXU matmul (+ bias). ----
    xw_sc[...] = (
        jnp.dot(x_ref[...], wih_ref[...], preferred_element_type=jnp.float32)
        + b_ref[...]
    )

    # ---- Phase 2: serial recurrence; only h @ W_hh^T on the critical path. --
    h_sc[...] = jnp.zeros_like(h_sc)
    c_sc[...] = jnp.zeros_like(c_sc)
    lengths = len_ref[...]                       # (Bp, 1) int32

    def step(t, carry):
        h_prev = h_sc[...]                       # (Bp, Hp) f32
        c_prev = c_sc[...]
        row = pl.multiple_of(t * Bp, 8)
        gates = xw_sc[pl.ds(row, Bp), :] + jnp.dot(
            h_prev.astype(jnp.bfloat16), whh_ref[...],
            preferred_element_type=jnp.float32)  # (Bp, 4Hp) f32, order i,f,g,o

        i_g = jax.nn.sigmoid(gates[:, 0 * Hp:1 * Hp])
        f_g = jax.nn.sigmoid(gates[:, 1 * Hp:2 * Hp])
        g_g = jnp.tanh(gates[:, 2 * Hp:3 * Hp])
        o_g = jax.nn.sigmoid(gates[:, 3 * Hp:4 * Hp])

        c_new = f_g * c_prev + i_g * g_g
        h_new = o_g * jnp.tanh(c_new)

        # pack_padded_sequence semantics: state only advances while t < length
        valid = t < lengths                      # (Bp, 1) bool
        h_sc[...] = jnp.where(valid, h_new, h_prev)
        c_sc[...] = jnp.where(valid, c_new, c_prev)
        return carry

    lax.fori_loop(0, maxlen_ref[0], step, 0)

    out_ref[...] = h_sc[...].astype(out_ref.dtype)


def masked_lstm_forward(data, mask, params):
    """data: (B, T, D) float (batch_first), mask: (B, T) bool or None.
    Returns (B, H) f32."""
    B, T, D = data.shape
    H = params["whhT"].shape[0]
    if mask is None:
        mask = jnp.ones((B, T), dtype=bool)

    Bp = _round_up(B, 8)          # sublane granularity
    Hp = _round_up(H, 128)        # lane granularity, per gate
    G = 4 * Hp

    lengths = jnp.clip(jnp.sum(mask.astype(jnp.int32), axis=1), 1, T)   # (B,)
    max_len = jnp.max(lengths).astype(jnp.int32).reshape(1)             # (1,)
    lengths_p = jnp.pad(lengths, (0, Bp - B), constant_values=1)
    lengths_p = lengths_p.reshape(Bp, 1).astype(jnp.int32)

    # Pad batch, go time-major, flatten to (T*Bp, D) rows, cast to bf16.
    data_p = jnp.pad(data.astype(jnp.float32), ((0, Bp - B), (0, 0), (0, 0)))
    x2d = jnp.transpose(data_p, (1, 0, 2)).reshape(T * Bp, D)
    x2d = x2d.astype(jnp.bfloat16)

    # Gate-padded, lane-aligned weights (bf16 for the MXU) and bias (f32).
    wihT = params["wihT"].astype(jnp.float32)        # (D, 4H)
    whhT = params["whhT"].astype(jnp.float32)        # (H, 4H)
    bias = params["bias"].astype(jnp.float32).reshape(1, 4 * H)

    def pad_gate_cols(w):
        parts = [w[:, k * H:(k + 1) * H] for k in range(4)]
        parts = [jnp.pad(p, ((0, 0), (0, Hp - H))) for p in parts]
        return jnp.concatenate(parts, axis=1)        # (rows, 4*Hp)

    wih_p = pad_gate_cols(wihT).astype(jnp.bfloat16)                     # (D, G)
    whh_p = jnp.pad(pad_gate_cols(whhT), ((0, Hp - H), (0, 0)))
    whh_p = whh_p.astype(jnp.bfloat16)                                   # (Hp, G)
    bias_p = pad_gate_cols(bias).astype(jnp.float32)                     # (1, G)

    grid_spec = pltpu.PrefetchScalarGridSpec(
        num_scalar_prefetch=1,                    # max_len -> SMEM
        grid=(1,),
        in_specs=[
            pl.BlockSpec((T * Bp, D), lambda i, ml: (0, 0)),   # x (all steps)
            pl.BlockSpec((Bp, 1), lambda i, ml: (0, 0)),       # lengths
            pl.BlockSpec((D, G), lambda i, ml: (0, 0)),        # W_ih^T
            pl.BlockSpec((Hp, G), lambda i, ml: (0, 0)),       # W_hh^T
            pl.BlockSpec((1, G), lambda i, ml: (0, 0)),        # bias
        ],
        out_specs=pl.BlockSpec((Bp, Hp), lambda i, ml: (0, 0)),
        scratch_shapes=[
            pltpu.VMEM((T * Bp, G), jnp.float32),  # hoisted x @ W_ih^T + b
            pltpu.VMEM((Bp, Hp), jnp.float32),     # h
            pltpu.VMEM((Bp, Hp), jnp.float32),     # c
        ],
    )

    out_p = pl.pallas_call(
        _lstm_kernel,
        out_shape=jax.ShapeDtypeStruct((Bp, Hp), jnp.float32),
        grid_spec=grid_spec,
        compiler_params=pltpu.CompilerParams(
            dimension_semantics=("arbitrary",),
            vmem_limit_bytes=32 * 1024 * 1024,
        ),
    )(max_len, x2d, lengths_p, wih_p, whh_p, bias_p)

    return out_p[:B, :H]


def masked_lstm_reference(data, mask, params):
    """Pure-JAX f32 reference (lax.scan) for correctness checking."""
    B, T, D = data.shape
    H = params["whhT"].shape[0]
    lengths = jnp.clip(mask.astype(jnp.int32).sum(axis=1), 1, T)
    bias = params["bias"].reshape(1, 4 * H)

    def step(carry, inp):
        h, c = carry
        x_t, t = inp
        gates = x_t @ params["wihT"] + h @ params["whhT"] + bias
        i_g = jax.nn.sigmoid(gates[:, :H])
        f_g = jax.nn.sigmoid(gates[:, H:2 * H])
        g_g = jnp.tanh(gates[:, 2 * H:3 * H])
        o_g = jax.nn.sigmoid(gates[:, 3 * H:])
        c_new = f_g * c + i_g * g_g
        h_new = o_g * jnp.tanh(c_new)
        valid = (t < lengths)[:, None]
        return (jnp.where(valid, h_new, h), jnp.where(valid, c_new, c)), None

    init = (jnp.zeros((B, H), jnp.float32), jnp.zeros((B, H), jnp.float32))
    xs = (jnp.transpose(data, (1, 0, 2)).astype(jnp.float32), jnp.arange(T))
    (h, _c), _ = lax.scan(step, init, xs)
    return h


def init_params(key, dim_in, hidden_dim):
    """PyTorch nn.LSTM-style init: U(-1/sqrt(H), 1/sqrt(H)), gate order i,f,g,o."""
    k = 1.0 / np.sqrt(hidden_dim)
    k1, k2, k3, k4 = jax.random.split(key, 4)
    w_ih = jax.random.uniform(k1, (4 * hidden_dim, dim_in), jnp.float32, -k, k)
    w_hh = jax.random.uniform(k2, (4 * hidden_dim, hidden_dim), jnp.float32, -k, k)
    b_ih = jax.random.uniform(k3, (4 * hidden_dim,), jnp.float32, -k, k)
    b_hh = jax.random.uniform(k4, (4 * hidden_dim,), jnp.float32, -k, k)
    return {
        "wihT": w_ih.T,            # (D, 4H)
        "whhT": w_hh.T,            # (H, 4H)
        "bias": b_ih + b_hh,       # (4H,)
    }


if __name__ == "__main__":
    B, T, D, H = 2, 8, 16, 32

    key = jax.random.PRNGKey(0)
    k_data, k_param = jax.random.split(key)
    data = jax.random.normal(k_data, (B, T, D), jnp.float32)

    # Variable-length valid prefixes (like a padded batch): lengths = [5, 8]
    lens = jnp.array([5, 8], dtype=jnp.int32)
    mask = jnp.arange(T)[None, :] < lens[:, None]       # (B, T) bool

    params = init_params(k_param, D, H)

    out = masked_lstm_forward(data, mask, params)
    out = jax.block_until_ready(out)

    ref = masked_lstm_reference(data, mask, params)
    # bf16 matmul operands (f32 accumulation) -> relaxed tolerance vs f32 ref.
    np.testing.assert_allclose(np.asarray(out), np.asarray(ref),
                               rtol=2e-2, atol=2e-2)

    print("KERNEL_OK")
</pallas_src>

<mosaic_0001>
module attributes {stable_mosaic.version = 11 : i64} {
  func.func @_lstm_kernel(%arg0: i32, %arg1: memref<1xi32, #tpu.memory_space<smem>>, %arg2: memref<64x16xbf16, #tpu.memory_space<vmem>>, %arg3: memref<8x1xi32, #tpu.memory_space<vmem>>, %arg4: memref<16x512xbf16, #tpu.memory_space<vmem>>, %arg5: memref<128x512xbf16, #tpu.memory_space<vmem>>, %arg6: memref<1x512xf32, #tpu.memory_space<vmem>>, %arg7: memref<8x128xf32, #tpu.memory_space<vmem>>, %arg8: memref<64x512xf32, #tpu.memory_space<vmem>>, %arg9: memref<8x128xf32, #tpu.memory_space<vmem>>, %arg10: memref<8x128xf32, #tpu.memory_space<vmem>>) attributes {dimension_semantics = [#tpu.dimension_semantics<arbitrary>], iteration_bounds = array<i64: 1>, scalar_prefetch = 1 : i64, scratch_operands = 3 : i64, tpu.core_type = #tpu.core_type<tc>, window_params = [{pipeline_mode = #tpu.pipeline_mode<synchronous>, transform_indices = @transform_0, window_bounds = array<i64: 64, 16>}, {pipeline_mode = #tpu.pipeline_mode<synchronous>, transform_indices = @transform_1, window_bounds = array<i64: 8, 1>}, {pipeline_mode = #tpu.pipeline_mode<synchronous>, transform_indices = @transform_2, window_bounds = array<i64: 16, 512>}, {pipeline_mode = #tpu.pipeline_mode<synchronous>, transform_indices = @transform_3, window_bounds = array<i64: 128, 512>}, {pipeline_mode = #tpu.pipeline_mode<synchronous>, transform_indices = @transform_4, window_bounds = array<i64: 1, 512>}, {pipeline_mode = #tpu.pipeline_mode<synchronous>, transform_indices = @transform_5, window_bounds = array<i64: 8, 128>}]} {
    %c0 = arith.constant 0 : index
    %c0_0 = arith.constant 0 : index
    %0 = vector.load %arg2[%c0, %c0_0] : memref<64x16xbf16, #tpu.memory_space<vmem>>, vector<64x16xbf16>
    %c0_1 = arith.constant 0 : index
    %c0_2 = arith.constant 0 : index
    %1 = vector.load %arg4[%c0_1, %c0_2] : memref<16x512xbf16, #tpu.memory_space<vmem>>, vector<16x512xbf16>
    %cst = arith.constant dense<0.000000e+00> : vector<64x512xf32>
    %2 = tpu.matmul %0, %1, %cst {dimension_numbers = #tpu.dot_dimension_numbers<[1], [0], [0], [1], [0, 0, 1, 1], [], []>} : vector<64x16xbf16>, vector<16x512xbf16>, vector<64x512xf32> -> vector<64x512xf32>
    %c0_3 = arith.constant 0 : index
    %c0_4 = arith.constant 0 : index
    %3 = vector.load %arg6[%c0_3, %c0_4] : memref<1x512xf32, #tpu.memory_space<vmem>>, vector<1x512xf32>
    %4 = vector.broadcast %3 : vector<1x512xf32> to vector<64x512xf32>
    %5 = arith.addf %2, %4 : vector<64x512xf32>
    %c0_5 = arith.constant 0 : index
    %c0_6 = arith.constant 0 : index
    %6 = vector.load %arg8[%c0_5, %c0_6] : memref<64x512xf32, #tpu.memory_space<vmem>>, vector<64x512xf32>
    tpu.vector_store %arg8[%c0_5, %c0_6], %5 {strides = array<i32>} : memref<64x512xf32, #tpu.memory_space<vmem>>, vector<64x512xf32>,
    %cst_7 = arith.constant 0.000000e+00 : f32
    %7 = vector.broadcast %cst_7 : f32 to vector<8x128xf32>
    %c0_8 = arith.constant 0 : index
    %c0_9 = arith.constant 0 : index
    %8 = vector.load %arg9[%c0_8, %c0_9] : memref<8x128xf32, #tpu.memory_space<vmem>>, vector<8x128xf32>
    tpu.vector_store %arg9[%c0_8, %c0_9], %7 {strides = array<i32>} : memref<8x128xf32, #tpu.memory_space<vmem>>, vector<8x128xf32>,
    %cst_10 = arith.constant 0.000000e+00 : f32
    %9 = vector.broadcast %cst_10 : f32 to vector<8x128xf32>
    %c0_11 = arith.constant 0 : index
    %c0_12 = arith.constant 0 : index
    %10 = vector.load %arg10[%c0_11, %c0_12] : memref<8x128xf32, #tpu.memory_space<vmem>>, vector<8x128xf32>
    tpu.vector_store %arg10[%c0_11, %c0_12], %9 {strides = array<i32>} : memref<8x128xf32, #tpu.memory_space<vmem>>, vector<8x128xf32>,
    %c0_13 = arith.constant 0 : index
    %c0_14 = arith.constant 0 : index
    %11 = vector.load %arg3[%c0_13, %c0_14] : memref<8x1xi32, #tpu.memory_space<vmem>>, vector<8x1xi32>
    %c0_15 = arith.constant 0 : index
    %12 = memref.load %arg1[%c0_15] : memref<1xi32, #tpu.memory_space<smem>>
    %c0_i32 = arith.constant 0 : i32
    %c0_i32_16 = arith.constant 0 : i32
    %13 = arith.subi %12, %c0_i32_16 : i32
    %14 = arith.addi %c0_i32_16, %13 : i32
    %c1_i32 = arith.constant 1 : i32
    scf.for %arg11 = %c0_i32_16 to %14 step %c1_i32  : i32 {
      %c0_21 = arith.constant 0 : index
      %c0_22 = arith.constant 0 : index
      %17 = vector.load %arg9[%c0_21, %c0_22] : memref<8x128xf32, #tpu.memory_space<vmem>>, vector<8x128xf32>
      %c0_23 = arith.constant 0 : index
      %c0_24 = arith.constant 0 : index
      %18 = vector.load %arg10[%c0_23, %c0_24] : memref<8x128xf32, #tpu.memory_space<vmem>>, vector<8x128xf32>
      %c8_i32 = arith.constant 8 : i32
      %19 = arith.muli %arg11, %c8_i32 : i32
      %20 = tpu.assume_multiple %19, 8 : i32
      %21 = arith.index_cast %20 : i32 to index
      %c0_25 = arith.constant 0 : index
      %22 = vector.load %arg8[%21, %c0_25] : memref<64x512xf32, #tpu.memory_space<vmem>>, vector<8x512xf32>
      %23 = arith.truncf %17 : vector<8x128xf32> to vector<8x128xbf16>
      %c0_26 = arith.constant 0 : index
      %c0_27 = arith.constant 0 : index
      %24 = vector.load %arg5[%c0_26, %c0_27] : memref<128x512xbf16, #tpu.memory_space<vmem>>, vector<128x512xbf16>
      %cst_28 = arith.constant dense<0.000000e+00> : vector<8x512xf32>
      %25 = tpu.matmul %23, %24, %cst_28 {dimension_numbers = #tpu.dot_dimension_numbers<[1], [0], [0], [1], [0, 0, 1, 1], [], []>} : vector<8x128xbf16>, vector<128x512xbf16>, vector<8x512xf32> -> vector<8x512xf32>
      %26 = arith.addf %22, %25 : vector<8x512xf32>
      %27 = vector.extract_strided_slice %26 {offsets = [0, 0], sizes = [8, 128], strides = [1, 1]} : vector<8x512xf32> to vector<8x128xf32>
      %28 = arith.negf %27 : vector<8x128xf32>
      %29 = math.exp %28 : vector<8x128xf32>
      %cst_29 = arith.constant 1.000000e+00 : f32
      %30 = vector.broadcast %cst_29 : f32 to vector<8x128xf32>
      %31 = arith.addf %30, %29 : vector<8x128xf32>
      %32 = arith.divf %30, %31 : vector<8x128xf32>
      %33 = vector.extract_strided_slice %26 {offsets = [0, 128], sizes = [8, 128], strides = [1, 1]} : vector<8x512xf32> to vector<8x128xf32>
      %34 = arith.negf %33 : vector<8x128xf32>
      %35 = math.exp %34 : vector<8x128xf32>
      %cst_30 = arith.constant 1.000000e+00 : f32
      %36 = vector.broadcast %cst_30 : f32 to vector<8x128xf32>
      %37 = arith.addf %36, %35 : vector<8x128xf32>
      %38 = arith.divf %36, %37 : vector<8x128xf32>
      %39 = vector.extract_strided_slice %26 {offsets = [0, 256], sizes = [8, 128], strides = [1, 1]} : vector<8x512xf32> to vector<8x128xf32>
      %40 = math.tanh %39 : vector<8x128xf32>
      %41 = vector.extract_strided_slice %26 {offsets = [0, 384], sizes = [8, 128], strides = [1, 1]} : vector<8x512xf32> to vector<8x128xf32>
      %42 = arith.negf %41 : vector<8x128xf32>
      %43 = math.exp %42 : vector<8x128xf32>
      %cst_31 = arith.constant 1.000000e+00 : f32
      %44 = vector.broadcast %cst_31 : f32 to vector<8x128xf32>
      %45 = arith.addf %44, %43 : vector<8x128xf32>
      %46 = arith.divf %44, %45 : vector<8x128xf32>
      %47 = arith.mulf %38, %18 : vector<8x128xf32>
      %48 = arith.mulf %32, %40 : vector<8x128xf32>
      %49 = arith.addf %47, %48 : vector<8x128xf32>
      %50 = math.tanh %49 : vector<8x128xf32>
      %51 = arith.mulf %46, %50 : vector<8x128xf32>
      %52 = vector.broadcast %arg11 : i32 to vector<8x1xi32>
      %53 = arith.cmpi slt, %52, %11 : vector<8x1xi32>
      %54 = vector.shape_cast %53 : vector<8x1xi1> to vector<8x1xi1>
      %55 = vector.broadcast %54 : vector<8x1xi1> to vector<8x128xi1>
      %56 = arith.select %55, %51, %17 : vector<8x128xi1>, vector<8x128xf32>
      %c0_32 = arith.constant 0 : index
      %c0_33 = arith.constant 0 : index
      %57 = vector.load %arg9[%c0_32, %c0_33] : memref<8x128xf32, #tpu.memory_space<vmem>>, vector<8x128xf32>
      tpu.vector_store %arg9[%c0_32, %c0_33], %56 {strides = array<i32>} : memref<8x128xf32, #tpu.memory_space<vmem>>, vector<8x128xf32>,
      %58 = vector.shape_cast %53 : vector<8x1xi1> to vector<8x1xi1>
      %59 = vector.broadcast %58 : vector<8x1xi1> to vector<8x128xi1>
      %60 = arith.select %59, %49, %18 : vector<8x128xi1>, vector<8x128xf32>
      %c0_34 = arith.constant 0 : index
      %c0_35 = arith.constant 0 : index
      %61 = vector.load %arg10[%c0_34, %c0_35] : memref<8x128xf32, #tpu.memory_space<vmem>>, vector<8x128xf32>
      tpu.vector_store %arg10[%c0_34, %c0_35], %60 {strides = array<i32>} : memref<8x128xf32, #tpu.memory_space<vmem>>, vector<8x128xf32>,
    }
    %c0_17 = arith.constant 0 : index
    %c0_18 = arith.constant 0 : index
    %15 = vector.load %arg9[%c0_17, %c0_18] : memref<8x128xf32, #tpu.memory_space<vmem>>, vector<8x128xf32>
    %c0_19 = arith.constant 0 : index
    %c0_20 = arith.constant 0 : index
    %16 = vector.load %arg7[%c0_19, %c0_20] : memref<8x128xf32, #tpu.memory_space<vmem>>, vector<8x128xf32>
    tpu.vector_store %arg7[%c0_19, %c0_20], %15 {strides = array<i32>} : memref<8x128xf32, #tpu.memory_space<vmem>>, vector<8x128xf32>,
    return
  }
  func.func @transform_0(%arg0: i32, %arg1: memref<1xi32, #tpu.memory_space<smem>>) -> (i32, i32) {
    %c0_i32 = arith.constant 0 : i32
    %c0_i32_0 = arith.constant 0 : i32
    %c0_i32_1 = arith.constant 0 : i32
    return %c0_i32, %c0_i32_0 : i32, i32
  }
  func.func @transform_1(%arg0: i32, %arg1: memref<1xi32, #tpu.memory_space<smem>>) -> (i32, i32) {
    %c0_i32 = arith.constant 0 : i32
    %c0_i32_0 = arith.constant 0 : i32
    %c0_i32_1 = arith.constant 0 : i32
    return %c0_i32, %c0_i32_0 : i32, i32
  }
  func.func @transform_2(%arg0: i32, %arg1: memref<1xi32, #tpu.memory_space<smem>>) -> (i32, i32) {
    %c0_i32 = arith.constant 0 : i32
    %c0_i32_0 = arith.constant 0 : i32
    %c0_i32_1 = arith.constant 0 : i32
    return %c0_i32, %c0_i32_0 : i32, i32
  }
  func.func @transform_3(%arg0: i32, %arg1: memref<1xi32, #tpu.memory_space<smem>>) -> (i32, i32) {
    %c0_i32 = arith.constant 0 : i32
    %c0_i32_0 = arith.constant 0 : i32
    %c0_i32_1 = arith.constant 0 : i32
    return %c0_i32, %c0_i32_0 : i32, i32
  }
  func.func @transform_4(%arg0: i32, %arg1: memref<1xi32, #tpu.memory_space<smem>>) -> (i32, i32) {
    %c0_i32 = arith.constant 0 : i32
    %c0_i32_0 = arith.constant 0 : i32
    %c0_i32_1 = arith.constant 0 : i32
    return %c0_i32, %c0_i32_0 : i32, i32
  }
  func.func @transform_5(%arg0: i32, %arg1: memref<1xi32, #tpu.memory_space<smem>>) -> (i32, i32) {
    %c0_i32 = arith.constant 0 : i32
    %c0_i32_0 = arith.constant 0 : i32
    %c0_i32_1 = arith.constant 0 : i32
    return %c0_i32, %c0_i32_0 : i32, i32
  }
}

</mosaic_0001>

<llo_original>
// kernel: tpu_custom_call.1
$region0: #{tpu_custom_call.1}
  #allocation0 [shape = 'u32[]', space=smem, size = 0x4, offset = 0x4, fixed_abs, tag = 'smem constant byte address 0x4 - core index']
  #allocation1 [shape = 'u32[144,128]{1,0:T(1,128)}', space=vmem, size = 0x12000, scoped, tag = 'internal scratch']
  #allocation2 [shape = 'f32[64,512]{1,0:T(8,128)}', space=vmem, size = 0x20000, scoped, tag = 'scratch operand']
  #allocation3 [shape = 'f32[8,128]{1,0:T(8,128)}', space=vmem, size = 0x1000, scoped, tag = 'scratch operand']
  #allocation4 [shape = 'f32[8,128]{1,0:T(8,128)}', space=vmem, size = 0x1000, scoped, tag = 'scratch operand']
  #allocation5 [shape = 's32[1]{0}', space=sflag, size = 0x4, scoped, tag = 'scoped memory for tpu_custom_call.1']
  #allocation6 [shape = 's32[1]{0:T(128)S(6)}', space=smem, size = 0x200, scoped, tag = 'prefetched SMEM operand 0']
  %s0 = inlined_call_operand.<no memory space> [shape: s32[1], index: 0, kind: input, shape index: {}]
  %s1 = inlined_call_operand.vmem [shape: bf16[64,16], index: 1, kind: input, shape index: {}]
  %s2 = inlined_call_operand.vmem [shape: s32[8,1], index: 2, kind: input, shape index: {}]
  %s3 = inlined_call_operand.vmem [shape: bf16[16,512], index: 3, kind: input, shape index: {}]
  %s4 = inlined_call_operand.hbm [shape: bf16[128,512], index: 4, kind: input, shape index: {}]
  %s5 = inlined_call_operand.vmem [shape: f32[1,512], index: 5, kind: input, shape index: {}]
  %s6 = inlined_call_operand.hbm [shape: f32[8,128], index: 6, kind: output, shape index: {}]
  %s7 = sld [smem:[#allocation0]]
  $region41: #{tpu_custom_call.1} parent=0
    _
  %s9 = ssub.s32 1, %s7
  %s10 = scalar_select 0, %s9, %s7
  %11 = sst [smem:[#allocation6]] %s0
  $region1: #{tpu_custom_call.1} parent=0
    #allocation7 [shape = 'u8[131072]{0}', space=vmem, size = 0x20000, scoped, tag = 'input window, operand 4, single buffered']
    #allocation8 [shape = 's32[1]{0}', space=sflag, size = 0x4, scoped, tag = 'scoped memory for tpu_custom_call.1']
    #allocation9 [shape = 's32[1]{0}', space=sflag, size = 0x4, scoped, tag = 'scoped memory for tpu_custom_call.1']
    #allocation10 [shape = 'u8[4096]{0}', space=vmem, size = 0x1000, scoped, tag = 'output window, operand 0, single buffered']
    %12 = vsyncpa [#allocation8], 0
    %13 = vsyncpa [#allocation9], 0
    // Predicated region
    $region2: #{tpu_custom_call.1} parent=1 // pred_check
      _
    $region3: #{tpu_custom_call.1} parent=1 // pred_check_branch
      %15 = sbr.rel (0) target = $region5
    $region4: #{tpu_custom_call.1} parent=1 // pred_region
      _
    $region5: #{tpu_custom_call.1} parent=1 // pred_fallthru
      _
    // Predicated region
    $region6: #{tpu_custom_call.1} parent=1 // pred_check
      _
    $region7: #{tpu_custom_call.1} parent=1 // pred_check_branch
      %17 = sbr.rel (0) target = $region9
    $region8: #{tpu_custom_call.1} parent=1 // pred_region
      _
    $region9: #{tpu_custom_call.1} parent=1 // pred_fallthru
      _
    // Predicated region
    $region10: #{tpu_custom_call.1} parent=1 // pred_check
      _
    $region11: #{tpu_custom_call.1} parent=1 // pred_check_branch
      %19 = sbr.rel (0) target = $region13
    $region12: #{tpu_custom_call.1} parent=1 // pred_region
      _
    $region13: #{tpu_custom_call.1} parent=1 // pred_fallthru
      _
    // Predicated region
    $region14: #{tpu_custom_call.1} parent=1 // pred_check
      _
    $region15: #{tpu_custom_call.1} parent=1 // pred_check_branch
      %21 = sbr.rel (0) target = $region17
    $region16: #{tpu_custom_call.1} parent=1 // pred_region
      %s23 = ssub.s32 4096, 4096
      %24 = vsyncadd [#allocation8], %s23
      %s25 = sshll.u32 [#allocation7], 4
      %s26 = int_to_ptr.vmem [resolvable:$true] %s25
      %31 = dma.hbm_to_vmem [thread:$0]  %s4, 4096, %s26, [#allocation8], 256, 256, 16
    $region17: #{tpu_custom_call.1} parent=1 // pred_fallthru
      _
    // Predicated region
    $region18: #{tpu_custom_call.1} parent=1 // pred_check
      _
    $region19: #{tpu_custom_call.1} parent=1 // pred_check_branch
      %33 = sbr.rel (0) target = $region21
    $region20: #{tpu_custom_call.1} parent=1 // pred_region
      _
    $region21: #{tpu_custom_call.1} parent=1 // pred_fallthru
      _
    // Predicated region
    $region22: #{tpu_custom_call.1} parent=1 // pred_check
      _
    $region23: #{tpu_custom_call.1} parent=1 // pred_check_branch
      %35 = sbr.rel (0) target = $region25
    $region24: #{tpu_custom_call.1} parent=1 // pred_region
      %36 = dma.done [#allocation8], 4096
    $region25: #{tpu_custom_call.1} parent=1 // pred_fallthru
      _
    %v38 = vld [vmem:[%s1] sm:$0xf]
    %v39 = vld [vmem:[%s1 + $0x4] sm:$0xf]
    %v40 = vld [vmem:[%s1 + $0x8] sm:$0xf]
    %v41 = vld [vmem:[%s1 + $0xc] sm:$0xf]
    %v42 = vld [vmem:[%s1 + $0x10] sm:$0xf]
    %v43 = vld [vmem:[%s1 + $0x14] sm:$0xf]
    %v44 = vld [vmem:[%s1 + $0x18] sm:$0xf]
    %v45 = vld [vmem:[%s1 + $0x1c] sm:$0xf]
    %v46 = vld [vmem:[%s3] sm:$0xff]
    %v47 = vld [vmem:[%s3 + $0x8] sm:$0xff]
    %v48 = vld [vmem:[%s3 + $0x10] sm:$0xff]
    %v49 = vld [vmem:[%s3 + $0x18] sm:$0xff]
    %v50 = vld [vmem:[%s5] sm:$0xf]
    %v52 = vlaneseq
    %v53 = vshrl.u32 %v52, 7
    %v54 = vsub.s32 0, %v53
    %v55 = vrot.slane %v50, %v54
    %v56 = vlaneseq
    %v57 = vshrl.u32 %v56, 7
    %v58 = vsub.s32 1, %v57
    %v59 = vrot.slane %v50, %v58
    %v60 = vlaneseq
    %v61 = vshrl.u32 %v60, 7
    %v62 = vsub.s32 2, %v61
    %v63 = vrot.slane %v50, %v62
    %v64 = vlaneseq
    %v65 = vshrl.u32 %v64, 7
    %v66 = vsub.s32 3, %v65
    %v67 = vrot.slane %v50, %v66
    %v80 = vunpack.c.l.b16 %v38
    %v81 = vunpack.c.l.b16 %v39
    %v82 = vunpack.c.l.b16 %v40
    %v83 = vunpack.c.l.b16 %v41
    %v84 = vunpack.c.l.b16 %v42
    %v85 = vunpack.c.l.b16 %v43
    %v86 = vunpack.c.l.b16 %v44
    %v87 = vunpack.c.l.b16 %v45
    %v88 = vpack.c.b16 %v81, %v80
    %v89 = vpack.c.b16 %v83, %v82
    %v90 = vpack.c.b16 %v85, %v84
    %v91 = vpack.c.b16 %v87, %v86
    %v96 = vunpack.c.l.b16 %v46
    %v97 = vunpack.c.h.b16 %v46
    %v98 = vunpack.c.l.b16 %v47
    %v99 = vunpack.c.h.b16 %v47
    %v100 = vunpack.c.l.b16 %v48
    %v101 = vunpack.c.h.b16 %v48
    %v102 = vunpack.c.l.b16 %v49
    %v103 = vunpack.c.h.b16 %v49
    %v104 = vpack.c.b16 %v100, %v96
    %v105 = vpack.c.b16 %v101, %v97
    %v106 = vpack.c.b16 %v102, %v98
    %v107 = vpack.c.b16 %v103, %v99
    %vm112 = vcmask 130048
    %v114 = vsel %vm112, %v88, 0
    %v117 = vsel %vm112, %v89, 0
    %v120 = vsel %vm112, %v90, 0
    %v123 = vsel %vm112, %v91, 0
    %125 = vmatprep.subr.bf16.mxu0 %v105
    %126 = vmatpush1.bf16.msra.mxu0 %v104
    %127 = vmatprep.subr.bf16.mxu0 0
    %128 = vmatpush1.bf16.msra.mxu0 0
    %129 = vmatprep.subr.bf16.mxu0 0
    %130 = vmatpush1.bf16.msra.mxu0 0
    %131 = vmatprep.subr.bf16.mxu0 0
    %132 = vmatpush1.bf16.msra.mxu0 0
    %133 = vmatprep.subr.bf16.mxu0 0
    %134 = vmatpush1.bf16.msra.mxu0 0
    %135 = vmatprep.subr.bf16.mxu0 0
    %136 = vmatpush1.bf16.msra.mxu0 0
    %137 = vmatprep.subr.bf16.mxu0 0
    %138 = vmatpush1.bf16.msra.mxu0 0
    %139 = vmatprep.subr.bf16.mxu0 0
    %140 = vmatpush1.bf16.msra.mxu0 0
    %141 = vmatprep.subr.bf16.mxu0 0
    %142 = vmatpush1.bf16.msra.mxu0 0
    %143 = vmatprep.subr.bf16.mxu0 0
    %144 = vmatpush1.bf16.msra.mxu0 0
    %145 = vmatprep.subr.bf16.mxu0 0
    %146 = vmatpush1.bf16.msra.mxu0 0
    %147 = vmatprep.subr.bf16.mxu0 0
    %148 = vmatpush1.bf16.msra.mxu0 0
    %149 = vmatprep.subr.bf16.mxu0 0
    %150 = vmatpush1.bf16.msra.mxu0 0
    %151 = vmatprep.subr.bf16.mxu0 0
    %152 = vmatpush1.bf16.msra.mxu0 0
    %153 = vmatprep.subr.bf16.mxu0 0
    %154 = vmatpush1.bf16.msra.mxu0 0
    %155 = vmatprep.subr.bf16.mxu0 0
    %156 = vmatpush1.bf16.msra.mxu0 0
    %157 = vmatprep.mubr.bf16.mxu0 0
    %158 = vmatmul.mubr.bf16.gmra.mrb[0].mxu0 %v114
    %v159 = vpop.f32.mrb[0].mxu0
    %v160 = vadd.f32 %v55, %v159
    %v161 = vpop.f32.mrb[0].mxu0
    %v162 = vadd.f32 %v59, %v161
    %v163 = vpop.f32.mrb[0].mxu0
    %v164 = vadd.f32 %v55, %v163
    %v165 = vpop.f32.mrb[0].mxu0
    %v166 = vadd.f32 %v59, %v165
    %167 = vmatprep.mubr.bf16.mxu0 0
    %168 = vmatmul.mubr.bf16.gmra.mrb[0].mxu0 %v117
    %v169 = vpop.f32.mrb[0].mxu0
    %v170 = vadd.f32 %v55, %v169
    %v171 = vpop.f32.mrb[0].mxu0
    %v172 = vadd.f32 %v59, %v171
    %v173 = vpop.f32.mrb[0].mxu0
    %v174 = vadd.f32 %v55, %v173
    %v175 = vpop.f32.mrb[0].mxu0
    %v176 = vadd.f32 %v59, %v175
    %177 = vmatprep.mubr.bf16.mxu0 0
    %178 = vmatmul.mubr.bf16.gmra.mrb[0].mxu0 %v120
    %v179 = vpop.f32.mrb[0].mxu0
    %v180 = vadd.f32 %v55, %v179
    %v181 = vpop.f32.mrb[0].mxu0
    %v182 = vadd.f32 %v59, %v181
    %v183 = vpop.f32.mrb[0].mxu0
    %v184 = vadd.f32 %v55, %v183
    %v185 = vpop.f32.mrb[0].mxu0
    %v186 = vadd.f32 %v59, %v185
    %187 = vmatprep.mubr.bf16.mxu0 0
    %188 = vmatmul.mubr.bf16.gmra.mrb[0].mxu0 %v123
    %v189 = vpop.f32.mrb[0].mxu0
    %v190 = vadd.f32 %v55, %v189
    %v191 = vpop.f32.mrb[0].mxu0
    %v192 = vadd.f32 %v59, %v191
    %v193 = vpop.f32.mrb[0].mxu0
    %v194 = vadd.f32 %v55, %v193
    %v195 = vpop.f32.mrb[0].mxu0
    %v196 = vadd.f32 %v59, %v195
    %197 = vdwg.mxu0
    %198 = vmatprep.subr.bf16.mxu0 %v107
    %199 = vmatpush1.bf16.msra.mxu0 %v106
    %200 = vmatprep.subr.bf16.mxu0 0
    %201 = vmatpush1.bf16.msra.mxu0 0
    %202 = vmatprep.subr.bf16.mxu0 0
    %203 = vmatpush1.bf16.msra.mxu0 0
    %204 = vmatprep.subr.bf16.mxu0 0
    %205 = vmatpush1.bf16.msra.mxu0 0
    %206 = vmatprep.subr.bf16.mxu0 0
    %207 = vmatpush1.bf16.msra.mxu0 0
    %208 = vmatprep.subr.bf16.mxu0 0
    %209 = vmatpush1.bf16.msra.mxu0 0
    %210 = vmatprep.subr.bf16.mxu0 0
    %211 = vmatpush1.bf16.msra.mxu0 0
    %212 = vmatprep.subr.bf16.mxu0 0
    %213 = vmatpush1.bf16.msra.mxu0 0
    %214 = vmatprep.subr.bf16.mxu0 0
    %215 = vmatpush1.bf16.msra.mxu0 0
    %216 = vmatprep.subr.bf16.mxu0 0
    %217 = vmatpush1.bf16.msra.mxu0 0
    %218 = vmatprep.subr.bf16.mxu0 0
    %219 = vmatpush1.bf16.msra.mxu0 0
    %220 = vmatprep.subr.bf16.mxu0 0
    %221 = vmatpush1.bf16.msra.mxu0 0
    %222 = vmatprep.subr.bf16.mxu0 0
    %223 = vmatpush1.bf16.msra.mxu0 0
    %224 = vmatprep.subr.bf16.mxu0 0
    %225 = vmatpush1.bf16.msra.mxu0 0
    %226 = vmatprep.subr.bf16.mxu0 0
    %227 = vmatpush1.bf16.msra.mxu0 0
    %228 = vmatprep.subr.bf16.mxu0 0
    %229 = vmatpush1.bf16.msra.mxu0 0
    %230 = vmatprep.mubr.bf16.mxu0 0
    %231 = vmatmul.mubr.bf16.gmra.mrb[0].mxu0 %v114
    %v232 = vpop.f32.mrb[0].mxu0
    %v233 = vadd.f32 %v63, %v232
    %v234 = vpop.f32.mrb[0].mxu0
    %v235 = vadd.f32 %v67, %v234
    %v236 = vpop.f32.mrb[0].mxu0
    %v237 = vadd.f32 %v63, %v236
    %v238 = vpop.f32.mrb[0].mxu0
    %v239 = vadd.f32 %v67, %v238
    %240 = vmatprep.mubr.bf16.mxu0 0
    %241 = vmatmul.mubr.bf16.gmra.mrb[0].mxu0 %v117
    %v242 = vpop.f32.mrb[0].mxu0
    %v243 = vadd.f32 %v63, %v242
    %v244 = vpop.f32.mrb[0].mxu0
    %v245 = vadd.f32 %v67, %v244
    %v246 = vpop.f32.mrb[0].mxu0
    %v247 = vadd.f32 %v63, %v246
    %v248 = vpop.f32.mrb[0].mxu0
    %v249 = vadd.f32 %v67, %v248
    %250 = vmatprep.mubr.bf16.mxu0 0
    %251 = vmatmul.mubr.bf16.gmra.mrb[0].mxu0 %v120
    %v252 = vpop.f32.mrb[0].mxu0
    %v253 = vadd.f32 %v63, %v252
    %v254 = vpop.f32.mrb[0].mxu0
    %v255 = vadd.f32 %v67, %v254
    %v256 = vpop.f32.mrb[0].mxu0
    %v257 = vadd.f32 %v63, %v256
    %v258 = vpop.f32.mrb[0].mxu0
    %v259 = vadd.f32 %v67, %v258
    %260 = vmatprep.mubr.bf16.mxu0 0
    %261 = vmatmul.mubr.bf16.gmra.mrb[0].mxu0 %v123
    %v262 = vpop.f32.mrb[0].mxu0
    %v263 = vadd.f32 %v63, %v262
    %v264 = vpop.f32.mrb[0].mxu0
    %v265 = vadd.f32 %v67, %v264
    %v266 = vpop.f32.mrb[0].mxu0
    %v267 = vadd.f32 %v63, %v266
    %v268 = vpop.f32.mrb[0].mxu0
    %v269 = vadd.f32 %v67, %v268
    %270 = vdwg.mxu0
    %271 = vst [vmem:[#allocation2] sm:$0xff] %v160
    %272 = vst [vmem:[#allocation2 + $0x8] sm:$0xff] %v162
    %273 = vst [vmem:[#allocation2 + $0x10] sm:$0xff] %v233
    %274 = vst [vmem:[#allocation2 + $0x18] sm:$0xff] %v235
    %275 = vst [vmem:[#allocation2 + $0x20] sm:$0xff] %v164
    %276 = vst [vmem:[#allocation2 + $0x28] sm:$0xff] %v166
    %277 = vst [vmem:[#allocation2 + $0x30] sm:$0xff] %v237
    %278 = vst [vmem:[#allocation2 + $0x38] sm:$0xff] %v239
    %279 = vst [vmem:[#allocation2 + $0x40] sm:$0xff] %v170
    %280 = vst [vmem:[#allocation2 + $0x48] sm:$0xff] %v172
    %281 = vst [vmem:[#allocation2 + $0x50] sm:$0xff] %v243
    %282 = vst [vmem:[#allocation2 + $0x58] sm:$0xff] %v245
    %283 = vst [vmem:[#allocation2 + $0x60] sm:$0xff] %v174
    %284 = vst [vmem:[#allocation2 + $0x68] sm:$0xff] %v176
    %285 = vst [vmem:[#allocation2 + $0x70] sm:$0xff] %v247
    %286 = vst [vmem:[#allocation2 + $0x78] sm:$0xff] %v249
    %287 = vst [vmem:[#allocation2 + $0x80] sm:$0xff] %v180
    %288 = vst [vmem:[#allocation2 + $0x88] sm:$0xff] %v182
    %289 = vst [vmem:[#allocation2 + $0x90] sm:$0xff] %v253
    %290 = vst [vmem:[#allocation2 + $0x98] sm:$0xff] %v255
    %291 = vst [vmem:[#allocation2 + $0xa0] sm:$0xff] %v184
    %292 = vst [vmem:[#allocation2 + $0xa8] sm:$0xff] %v186
    %293 = vst [vmem:[#allocation2 + $0xb0] sm:$0xff] %v257
    %294 = vst [vmem:[#allocation2 + $0xb8] sm:$0xff] %v259
    %295 = vst [vmem:[#allocation2 + $0xc0] sm:$0xff] %v190
    %296 = vst [vmem:[#allocation2 + $0xc8] sm:$0xff] %v192
    %297 = vst [vmem:[#allocation2 + $0xd0] sm:$0xff] %v263
    %298 = vst [vmem:[#allocation2 + $0xd8] sm:$0xff] %v265
    %299 = vst [vmem:[#allocation2 + $0xe0] sm:$0xff] %v194
    %300 = vst [vmem:[#allocation2 + $0xe8] sm:$0xff] %v196
    %301 = vst [vmem:[#allocation2 + $0xf0] sm:$0xff] %v267
    %302 = vst [vmem:[#allocation2 + $0xf8] sm:$0xff] %v269
    %303 = vst [vmem:[#allocation3] sm:$0xff] 0.0
    %304 = vst [vmem:[#allocation4] sm:$0xff] 0.0
    %v305 = vld [vmem:[%s2] sm:$0xff]
    %s306 = sld [smem:[#allocation6]]
    // While loop
    $region26: #{tpu_custom_call.1} parent=1 // loop_pre_header
      _
    $region27: #{tpu_custom_call.1} parent=1 // loop_header
      %s308 = sphi 0, %s310
      %p309 = scmp.ge.s32.totalorder %s308, %s306
    $region28: #{tpu_custom_call.1} parent=1 // loop_header_branch
      %312 = sbr.rel (%p309) target = $region32
    $region29: #{tpu_custom_call.1} parent=1 // loop_body
      %v313 = vld [vmem:[#allocation3] sm:$0xff]
      %v314 = vld [vmem:[#allocation4] sm:$0xff]
      %s315 = smul.u32 %s308, 8
      %s316 = sshra.s32 %s315, 3
      %s317 = sand.u32 %s315, 7
      %s318 = smul.u32 %s316, 4
      %s319 = smul.addr %s318, 8
      %s320 = scalar_lea.vmem [#allocation2], %s319
      %v321 = vld [vmem:[%s320] sm:$0xff]
      %v322 = vld [vmem:[%s320 + $0x8] sm:$0xff]
      %v323 = vld [vmem:[%s320 + $0x10] sm:$0xff]
      %v324 = vld [vmem:[%s320 + $0x18] sm:$0xff]
      %v325 = vpack.c.bf16 %v313, %v313
      %v326 = vld [vmem:[#allocation7] sm:$0xff]
      %v327 = vld [vmem:[#allocation7 + $0x8] sm:$0xff]
      %v328 = vld [vmem:[#allocation7 + $0x10] sm:$0xff]
      %v329 = vld [vmem:[#allocation7 + $0x18] sm:$0xff]
      %v330 = vld [vmem:[#allocation7 + $0x20] sm:$0xff]
      %v331 = vld [vmem:[#allocation7 + $0x28] sm:$0xff]
      %v332 = vld [vmem:[#allocation7 + $0x30] sm:$0xff]
      %v333 = vld [vmem:[#allocation7 + $0x38] sm:$0xff]
      %v334 = vld [vmem:[#allocation7 + $0x40] sm:$0xff]
      %v335 = vld [vmem:[#allocation7 + $0x48] sm:$0xff]
      %v336 = vld [vmem:[#allocation7 + $0x50] sm:$0xff]
      %v337 = vld [vmem:[#allocation7 + $0x58] sm:$0xff]
      %v338 = vld [vmem:[#allocation7 + $0x60] sm:$0xff]
      %v339 = vld [vmem:[#allocation7 + $0x68] sm:$0xff]
      %v340 = vld [vmem:[#allocation7 + $0x70] sm:$0xff]
      %v341 = vld [vmem:[#allocation7 + $0x78] sm:$0xff]
      %v342 = vld [vmem:[#allocation7 + $0x80] sm:$0xff]
      %v343 = vld [vmem:[#allocation7 + $0x88] sm:$0xff]
      %v344 = vld [vmem:[#allocation7 + $0x90] sm:$0xff]
      %v345 = vld [vmem:[#allocation7 + $0x98] sm:$0xff]
      %v346 = vld [vmem:[#allocation7 + $0xa0] sm:$0xff]
      %v347 = vld [vmem:[#allocation7 + $0xa8] sm:$0xff]
      %v348 = vld [vmem:[#allocation7 + $0xb0] sm:$0xff]
      %v349 = vld [vmem:[#allocation7 + $0xb8] sm:$0xff]
      %v350 = vld [vmem:[#allocation7 + $0xc0] sm:$0xff]
      %v351 = vld [vmem:[#allocation7 + $0xc8] sm:$0xff]
      %v352 = vld [vmem:[#allocation7 + $0xd0] sm:$0xff]
      %v353 = vld [vmem:[#allocation7 + $0xd8] sm:$0xff]
      %v354 = vld [vmem:[#allocation7 + $0xe0] sm:$0xff]
      %v355 = vld [vmem:[#allocation7 + $0xe8] sm:$0xff]
      %v356 = vld [vmem:[#allocation7 + $0xf0] sm:$0xff]
      %v357 = vld [vmem:[#allocation7 + $0xf8] sm:$0xff]
      %v390 = vunpack.c.l.b16 %v326
      %v391 = vunpack.c.h.b16 %v326
      %v392 = vunpack.c.l.b16 %v327
      %v393 = vunpack.c.h.b16 %v327
      %v394 = vunpack.c.l.b16 %v328
      %v395 = vunpack.c.h.b16 %v328
      %v396 = vunpack.c.l.b16 %v329
      %v397 = vunpack.c.h.b16 %v329
      %v398 = vunpack.c.l.b16 %v330
      %v399 = vunpack.c.h.b16 %v330
      %v400 = vunpack.c.l.b16 %v331
      %v401 = vunpack.c.h.b16 %v331
      %v402 = vunpack.c.l.b16 %v332
      %v403 = vunpack.c.h.b16 %v332
      %v404 = vunpack.c.l.b16 %v333
      %v405 = vunpack.c.h.b16 %v333
      %v406 = vunpack.c.l.b16 %v334
      %v407 = vunpack.c.h.b16 %v334
      %v408 = vunpack.c.l.b16 %v335
      %v409 = vunpack.c.h.b16 %v335
      %v410 = vunpack.c.l.b16 %v336
      %v411 = vunpack.c.h.b16 %v336
      %v412 = vunpack.c.l.b16 %v337
      %v413 = vunpack.c.h.b16 %v337
      %v414 = vunpack.c.l.b16 %v338
      %v415 = vunpack.c.h.b16 %v338
      %v416 = vunpack.c.l.b16 %v339
      %v417 = vunpack.c.h.b16 %v339
      %v418 = vunpack.c.l.b16 %v340
      %v419 = vunpack.c.h.b16 %v340
      %v420 = vunpack.c.l.b16 %v341
      %v421 = vunpack.c.h.b16 %v341
      %v422 = vunpack.c.l.b16 %v342
      %v423 = vunpack.c.h.b16 %v342
      %v424 = vunpack.c.l.b16 %v343
      %v425 = vunpack.c.h.b16 %v343
      %v426 = vunpack.c.l.b16 %v344
      %v427 = vunpack.c.h.b16 %v344
      %v428 = vunpack.c.l.b16 %v345
      %v429 = vunpack.c.h.b16 %v345
      %v430 = vunpack.c.l.b16 %v346
      %v431 = vunpack.c.h.b16 %v346
      %v432 = vunpack.c.l.b16 %v347
      %v433 = vunpack.c.h.b16 %v347
      %v434 = vunpack.c.l.b16 %v348
      %v435 = vunpack.c.h.b16 %v348
      %v436 = vunpack.c.l.b16 %v349
      %v437 = vunpack.c.h.b16 %v349
      %v438 = vunpack.c.l.b16 %v350
      %v439 = vunpack.c.h.b16 %v350
      %v440 = vunpack.c.l.b16 %v351
      %v441 = vunpack.c.h.b16 %v351
      %v442 = vunpack.c.l.b16 %v352
      %v443 = vunpack.c.h.b16 %v352
      %v444 = vunpack.c.l.b16 %v353
      %v445 = vunpack.c.h.b16 %v353
      %v446 = vunpack.c.l.b16 %v354
      %v447 = vunpack.c.h.b16 %v354
      %v448 = vunpack.c.l.b16 %v355
      %v449 = vunpack.c.h.b16 %v355
      %v450 = vunpack.c.l.b16 %v356
      %v451 = vunpack.c.h.b16 %v356
      %v452 = vunpack.c.l.b16 %v357
      %v453 = vunpack.c.h.b16 %v357
      %v454 = vpack.c.b16 %v394, %v390
      %v455 = vpack.c.b16 %v395, %v391
      %v456 = vpack.c.b16 %v396, %v392
      %v457 = vpack.c.b16 %v397, %v393
      %v458 = vpack.c.b16 %v402, %v398
      %v459 = vpack.c.b16 %v403, %v399
      %v460 = vpack.c.b16 %v404, %v400
      %v461 = vpack.c.b16 %v405, %v401
      %v462 = vpack.c.b16 %v410, %v406
      %v463 = vpack.c.b16 %v411, %v407
      %v464 = vpack.c.b16 %v412, %v408
      %v465 = vpack.c.b16 %v413, %v409
      %v466 = vpack.c.b16 %v418, %v414
      %v467 = vpack.c.b16 %v419, %v415
      %v468 = vpack.c.b16 %v420, %v416
      %v469 = vpack.c.b16 %v421, %v417
      %v470 = vpack.c.b16 %v426, %v422
      %v471 = vpack.c.b16 %v427, %v423
      %v472 = vpack.c.b16 %v428, %v424
      %v473 = vpack.c.b16 %v429, %v425
      %v474 = vpack.c.b16 %v434, %v430
      %v475 = vpack.c.b16 %v435, %v431
      %v476 = vpack.c.b16 %v436, %v432
      %v477 = vpack.c.b16 %v437, %v433
      %v478 = vpack.c.b16 %v442, %v438
      %v479 = vpack.c.b16 %v443, %v439
      %v480 = vpack.c.b16 %v444, %v440
      %v481 = vpack.c.b16 %v445, %v441
      %v482 = vpack.c.b16 %v450, %v446
      %v483 = vpack.c.b16 %v451, %v447
      %v484 = vpack.c.b16 %v452, %v448
      %v485 = vpack.c.b16 %v453, %v449
      %518 = vmatprep.subr.bf16.mxu0 %v455
      %519 = vmatpush1.bf16.msra.mxu0 %v454
      %520 = vmatprep.subr.bf16.mxu0 %v459
      %521 = vmatpush1.bf16.msra.mxu0 %v458
      %522 = vmatprep.subr.bf16.mxu0 %v463
      %523 = vmatpush1.bf16.msra.mxu0 %v462
      %524 = vmatprep.subr.bf16.mxu0 %v467
      %525 = vmatpush1.bf16.msra.mxu0 %v466
      %526 = vmatprep.subr.bf16.mxu0 %v471
      %527 = vmatpush1.bf16.msra.mxu0 %v470
      %528 = vmatprep.subr.bf16.mxu0 %v475
      %529 = vmatpush1.bf16.msra.mxu0 %v474
      %530 = vmatprep.subr.bf16.mxu0 %v479
      %531 = vmatpush1.bf16.msra.mxu0 %v478
      %532 = vmatprep.subr.bf16.mxu0 %v483
      %533 = vmatpush1.bf16.msra.mxu0 %v482
      %534 = vmatprep.subr.bf16.mxu0 0
      %535 = vmatpush1.bf16.msra.mxu0 0
      %536 = vmatprep.subr.bf16.mxu0 0
      %537 = vmatpush1.bf16.msra.mxu0 0
      %538 = vmatprep.subr.bf16.mxu0 0
      %539 = vmatpush1.bf16.msra.mxu0 0
      %540 = vmatprep.subr.bf16.mxu0 0
      %541 = vmatpush1.bf16.msra.mxu0 0
      %542 = vmatprep.subr.bf16.mxu0 0
      %543 = vmatpush1.bf16.msra.mxu0 0
      %544 = vmatprep.subr.bf16.mxu0 0
      %545 = vmatpush1.bf16.msra.mxu0 0
      %546 = vmatprep.subr.bf16.mxu0 0
      %547 = vmatpush1.bf16.msra.mxu0 0
      %548 = vmatprep.subr.bf16.mxu0 0
      %549 = vmatpush1.bf16.msra.mxu0 0
      %550 = vmatprep.mubr.bf16.mxu0 0
      %551 = vmatmul.mubr.bf16.gmra.mrb[0].mxu0 %v325
      %v552 = vpop.f32.mrb[0].mxu0
      %v553 = vadd.f32 0.0, %v552
      %v554 = vpop.f32.mrb[0].mxu0
      %v555 = vadd.f32 0.0, %v554
      %v556 = vpop.f32.mrb[0].mxu0
      %v557 = vpop.f32.mrb[0].mxu0
      %558 = vdwg.mxu0
      %559 = vmatprep.subr.bf16.mxu0 %v457
      %560 = vmatpush1.bf16.msra.mxu0 %v456
      %561 = vmatprep.subr.bf16.mxu0 %v461
      %562 = vmatpush1.bf16.msra.mxu0 %v460
      %563 = vmatprep.subr.bf16.mxu0 %v465
      %564 = vmatpush1.bf16.msra.mxu0 %v464
      %565 = vmatprep.subr.bf16.mxu0 %v469
      %566 = vmatpush1.bf16.msra.mxu0 %v468
      %567 = vmatprep.subr.bf16.mxu0 %v473
      %568 = vmatpush1.bf16.msra.mxu0 %v472
      %569 = vmatprep.subr.bf16.mxu0 %v477
      %570 = vmatpush1.bf16.msra.mxu0 %v476
      %571 = vmatprep.subr.bf16.mxu0 %v481
      %572 = vmatpush1.bf16.msra.mxu0 %v480
      %573 = vmatprep.subr.bf16.mxu0 %v485
      %574 = vmatpush1.bf16.msra.mxu0 %v484
      %575 = vmatprep.subr.bf16.mxu0 0
      %576 = vmatpush1.bf16.msra.mxu0 0
      %577 = vmatprep.subr.bf16.mxu0 0
      %578 = vmatpush1.bf16.msra.mxu0 0
      %579 = vmatprep.subr.bf16.mxu0 0
      %580 = vmatpush1.bf16.msra.mxu0 0
      %581 = vmatprep.subr.bf16.mxu0 0
      %582 = vmatpush1.bf16.msra.mxu0 0
      %583 = vmatprep.subr.bf16.mxu0 0
      %584 = vmatpush1.bf16.msra.mxu0 0
      %585 = vmatprep.subr.bf16.mxu0 0
      %586 = vmatpush1.bf16.msra.mxu0 0
      %587 = vmatprep.subr.bf16.mxu0 0
      %588 = vmatpush1.bf16.msra.mxu0 0
      %589 = vmatprep.subr.bf16.mxu0 0
      %590 = vmatpush1.bf16.msra.mxu0 0
      %591 = vmatprep.mubr.bf16.mxu0 0
      %592 = vmatmul.mubr.bf16.gmra.mrb[0].mxu0 %v325
      %v593 = vpop.f32.mrb[0].mxu0
      %v594 = vadd.f32 0.0, %v593
      %v595 = vpop.f32.mrb[0].mxu0
      %v596 = vadd.f32 0.0, %v595
      %v597 = vpop.f32.mrb[0].mxu0
      %v598 = vpop.f32.mrb[0].mxu0
      %599 = vdwg.mxu0
      %v600 = vadd.f32 %v321, %v553
      %v601 = vadd.f32 %v322, %v555
      %v602 = vadd.f32 %v323, %v594
      %v603 = vadd.f32 %v324, %v596
      %v604 = vxor.u32 %v600, 2147483648
      %v605 = vmul.f32 %v604, 1.442695
      %v606 = vpow.pop %v605
      %v607 = vadd.f32 %v606, 1.0
      %v608 = vrcp.pop %v607
      %v609 = vmul.f32 1.0, %v608
      %v610 = vxor.u32 %v601, 2147483648
      %v611 = vmul.f32 %v610, 1.442695
      %v612 = vpow.pop %v611
      %v613 = vadd.f32 %v612, 1.0
      %v614 = vrcp.pop %v613
      %v615 = vmul.f32 1.0, %v614
      %v616 = vtanh.pop %v602
      %v617 = vxor.u32 %v603, 2147483648
      %v618 = vmul.f32 %v617, 1.442695
      %v619 = vpow.pop %v618
      %v620 = vadd.f32 %v619, 1.0
      %v621 = vrcp.pop %v620
      %v622 = vmul.f32 1.0, %v621
      %v623 = vmul.f32 %v615, %v314
      %v624 = vmul.f32 %v609, %v616
      %v625 = vadd.f32 %v623, %v624
      %v626 = vtanh.pop %v625
      %v627 = vmul.f32 %v622, %v626
      %v628 = vstv %s308
      %vm629 = vcmp.lt.s32.totalorder %v628, %v305
      %v630 = vsel %vm629, 1, 0
      %631 = vset.pattern.permute.xlu0 0
      %632 = vperm.xlu0 %631, %v630
      %v633 = vpop.permute.xlu0 %632
      %vm634 = vcmp.eq.s32.totalorder %v633, 1
      %v635 = vsel %vm634, %v627, %v313
      %636 = vst [vmem:[#allocation3] sm:$0xff] %v635
      %v637 = vsel %vm634, %v625, %v314
      %638 = vst [vmem:[#allocation4] sm:$0xff] %v637
    $region30: #{tpu_custom_call.1} parent=1 // loop_footer
      %s310 = sadd.s32 %s308, 1
    $region31: #{tpu_custom_call.1} parent=1 // loop_footer_branch
      %307 = sbr.rel target = $region27
    $region32: #{tpu_custom_call.1} parent=1 // loop_exit
      _
    %v639 = vld [vmem:[#allocation3] sm:$0xff]
    %640 = vst [vmem:[#allocation10] sm:$0xff] %v639
    // Predicated region
    $region33: #{tpu_custom_call.1} parent=1 // pred_check
      _
    $region34: #{tpu_custom_call.1} parent=1 // pred_check_branch
      %642 = sbr.rel (0) target = $region36
    $region35: #{tpu_custom_call.1} parent=1 // pred_region
      %s644 = ssub.s32 128, 128
      %645 = vsyncadd [#allocation9], %s644
      %s647 = sshll.u32 [#allocation10], 4
      %s648 = int_to_ptr.vmem [resolvable:$true] %s647
      %650 = dma.vmem_to_hbm [thread:$0]  %s648, 128, %s6, [#allocation9]
    $region36: #{tpu_custom_call.1} parent=1 // pred_fallthru
      _
    // Predicated region
    $region37: #{tpu_custom_call.1} parent=1 // pred_check
      _
    $region38: #{tpu_custom_call.1} parent=1 // pred_check_branch
      %652 = sbr.rel (0) target = $region40
    $region39: #{tpu_custom_call.1} parent=1 // pred_region
      %653 = dma.done [#allocation9], 128
    $region40: #{tpu_custom_call.1} parent=1 // pred_fallthru
      _
    %654 = vsyncpa [#allocation8], 1
    %655 = vsyncpa [#allocation9], 1

</llo_original>
